<compile_context>
chip_gen: v7x
topology: tpu7x:2x2x1
jax: 0.10.0
libtpu: 0.0.40
codegen_flags: <defaults>
</compile_context>

<pallas_src>
import functools

import jax
import jax.numpy as jnp
from jax.experimental import pallas as pl
from jax.experimental.pallas import tpu as pltpu


def _round_up(n, m):
    return ((n + m - 1) // m) * m


def _pad2d(a, rows, cols):
    return jnp.pad(a, ((0, rows - a.shape[0]), (0, cols - a.shape[1])))


def _student_net_kernel(x_ref, w1_ref, b1_ref, w2_ref, b2_ref, w3_ref, b3_ref,
                        o_ref, *, num_hidden, op_dtype):
    # fc1 + ReLU: MXU operands in op_dtype, f32 accumulation, f32 elementwise.
    h = jnp.dot(x_ref[...].astype(op_dtype), w1_ref[...],
                preferred_element_type=jnp.float32)
    h = jnp.maximum(h + b1_ref[...], 0.0)

    if num_hidden > 0:
        # Hoist only the loop-invariant (1, hid_p)/(hid_p, hid_p) loads.  Do NOT
        # materialize a (tb, hid_p) broadcast of b2 -- the sublane broadcast folds
        # into the VPU add and keeps vreg pressure low across the repeated-fc2 chain.
        w2 = w2_ref[...]
        b2 = b2_ref[...]

        def fc2_relu(hh):
            hh = jnp.dot(hh.astype(op_dtype), w2, preferred_element_type=jnp.float32)
            return jnp.maximum(hh + b2, 0.0)

        if num_hidden <= 4:
            for _ in range(num_hidden):              # shallow: static unroll
                h = fc2_relu(h)
        else:
            # Deep: rolled scf.for bounds code size and vreg live ranges.
            h = jax.lax.fori_loop(0, num_hidden, lambda _, hh: fc2_relu(hh), h)

    # fc3 (no activation)
    out = jnp.dot(h.astype(op_dtype), w3_ref[...], preferred_element_type=jnp.float32)
    o_ref[...] = (out + b3_ref[...]).astype(o_ref.dtype)


def student_net_forward(x, params, num_hidden, *, use_bf16_matmul=True, batch_tile=128):
    """StudentNet forward pass via one Pallas kernel.

    params (PyTorch nn.Linear convention):
        w1: (hidden, input),   b1: (hidden,)
        w2: (hidden, hidden),  b2: (hidden,)
        w3: (classes, hidden), b3: (classes,)
    """
    batch, input_size = x.shape
    hidden_size = params["w1"].shape[0]
    num_classes = params["w3"].shape[0]

    # Lane-dense padding targets.
    in_p = _round_up(input_size, 128)
    hid_p = _round_up(hidden_size, 128)
    cls_p = _round_up(num_classes, 128)

    # Batch tile: keep it small enough that activations stay well inside the vreg
    # file / spill slack, but prefer >= 2 grid steps so the x/out DMAs can pipeline
    # and v7x can shard the batch axis across both TensorCores.
    b8 = _round_up(batch, 8)
    tb = min(_round_up(batch_tile, 8), b8)
    if b8 // tb < 2 and b8 >= 16:
        tb = _round_up((b8 + 1) // 2, 8)
    pb = _round_up(b8, tb)

    op_dtype = jnp.bfloat16 if use_bf16_matmul else jnp.float32
    op_bytes = 2 if use_bf16_matmul else 4
    out_dtype = x.dtype
    out_bytes = jnp.dtype(out_dtype).itemsize

    # Wrapper-side glue: transpose to (in, out) so the kernel computes x @ W_t + b,
    # cast weights (and x) to the MXU operand dtype, keep biases f32, zero-pad.
    w1t = _pad2d(params["w1"].T.astype(op_dtype), in_p, hid_p)
    w2t = _pad2d(params["w2"].T.astype(op_dtype), hid_p, hid_p)
    w3t = _pad2d(params["w3"].T.astype(op_dtype), hid_p, cls_p)
    b1 = _pad2d(params["b1"].reshape(1, -1).astype(jnp.float32), 1, hid_p)
    b2 = _pad2d(params["b2"].reshape(1, -1).astype(jnp.float32), 1, hid_p)
    b3 = _pad2d(params["b3"].reshape(1, -1).astype(jnp.float32), 1, cls_p)
    xp = _pad2d(x.astype(op_dtype), pb, in_p)   # bf16 x halves per-step HBM traffic

    kernel = functools.partial(_student_net_kernel, num_hidden=num_hidden,
                               op_dtype=op_dtype)

    # VMEM budget: single-buffered weights/biases + double-buffered x / out tiles,
    # plus headroom; clamp to v7x's per-TC 64 MiB so the same sizing works everywhere.
    weight_vmem = (in_p * hid_p + hid_p * hid_p + hid_p * cls_p) * op_bytes \
                  + (2 * hid_p + cls_p) * 4
    io_vmem = 2 * tb * in_p * op_bytes + 2 * tb * cls_p * out_bytes
    vmem_limit = int(min(weight_vmem + io_vmem + (8 << 20), 64 << 20))

    flops = 2 * pb * (in_p * hid_p + num_hidden * hid_p * hid_p + hid_p * cls_p)
    bytes_accessed = (pb * in_p * op_bytes + pb * cls_p * out_bytes + weight_vmem)
    cost = pl.CostEstimate(flops=int(flops), transcendentals=0,
                           bytes_accessed=int(bytes_accessed))

    compiler_params = pltpu.CompilerParams(
        dimension_semantics=("parallel",),
        vmem_limit_bytes=vmem_limit,
    )

    def build(single_buffer_weights):
        # Constant-index operands gain nothing from double-buffering; Buffered(1)
        # halves their VMEM footprint.
        wk = dict(pipeline_mode=pl.Buffered(1)) if single_buffer_weights else {}
        return pl.pallas_call(
            kernel,
            out_shape=jax.ShapeDtypeStruct((pb, cls_p), out_dtype),
            grid=(pb // tb,),
            in_specs=[
                pl.BlockSpec((tb, in_p), lambda i: (i, 0)),           # x: tiled over batch
                pl.BlockSpec((in_p, hid_p), lambda i: (0, 0), **wk),  # w1: resident
                pl.BlockSpec((1, hid_p), lambda i: (0, 0), **wk),     # b1: resident
                pl.BlockSpec((hid_p, hid_p), lambda i: (0, 0), **wk), # w2: resident
                pl.BlockSpec((1, hid_p), lambda i: (0, 0), **wk),     # b2: resident
                pl.BlockSpec((hid_p, cls_p), lambda i: (0, 0), **wk), # w3: resident
                pl.BlockSpec((1, cls_p), lambda i: (0, 0), **wk),     # b3: resident
            ],
            out_specs=pl.BlockSpec((tb, cls_p), lambda i: (i, 0)),
            compiler_params=compiler_params,
            cost_estimate=cost,
        )

    try:
        out = build(True)(xp, w1t, b1, w2t, b2, w3t, b3)
    except Exception:
        # Fallback for jax builds where pipeline_mode=pl.Buffered(1) is rejected at
        # the top-level pallas_call; semantics are identical, just default buffering.
        out = build(False)(xp, w1t, b1, w2t, b2, w3t, b3)

    # Strip the lane/batch padding.
    return out[:batch, :num_classes]


def _init_linear(key, out_features, in_features):
    # Deterministic synthetic init mimicking nn.Linear's uniform(-1/sqrt(in), 1/sqrt(in)).
    kw, kb = jax.random.split(key)
    bound = 1.0 / jnp.sqrt(jnp.float32(in_features))
    w = jax.random.uniform(kw, (out_features, in_features), jnp.float32, -bound, bound)
    b = jax.random.uniform(kb, (out_features,), jnp.float32, -bound, bound)
    return w, b


def _make_params(key, input_size, hidden_size, num_classes):
    k1, k2, k3 = jax.random.split(key, 3)
    w1, b1 = _init_linear(k1, hidden_size, input_size)
    w2, b2 = _init_linear(k2, hidden_size, hidden_size)
    w3, b3 = _init_linear(k3, num_classes, hidden_size)
    return {"w1": w1, "b1": b1, "w2": w2, "b2": b2, "w3": w3, "b3": b3}


def _reference_forward(x, params, num_hidden):
    h = jnp.maximum(x @ params["w1"].T + params["b1"], 0.0)
    for _ in range(num_hidden):
        h = jnp.maximum(h @ params["w2"].T + params["b2"], 0.0)
    return h @ params["w3"].T + params["b3"]


if __name__ == "__main__":
    key = jax.random.PRNGKey(0)
    k_a, k_b = jax.random.split(key)

    # ---- Config 1: small shapes consistent with the module (static-unrolled fc2). ----
    batch, input_size, num_hidden, hidden_size, num_classes = 8, 16, 2, 32, 8
    kx, kp = jax.random.split(k_a)
    x = jax.random.normal(kx, (batch, input_size), jnp.float32)
    params = _make_params(kp, input_size, hidden_size, num_classes)
    ref = _reference_forward(x, params, num_hidden)

    out_f32 = jax.block_until_ready(
        student_net_forward(x, params, num_hidden, use_bf16_matmul=False))
    assert out_f32.shape == (batch, num_classes)
    assert jnp.allclose(out_f32, ref, atol=1e-4, rtol=1e-4)

    out_bf16 = jax.block_until_ready(
        student_net_forward(x, params, num_hidden, use_bf16_matmul=True))
    assert out_bf16.shape == (batch, num_classes)
    assert jnp.allclose(out_bf16, ref, atol=5e-2, rtol=5e-2)

    # ---- Config 2: deeper / wider — exercises the rolled fc2 loop and a 2-step grid. ----
    batch2, input2, num_hidden2, hidden2, classes2 = 192, 40, 5, 256, 10
    kx2, kp2 = jax.random.split(k_b)
    x2 = jax.random.normal(kx2, (batch2, input2), jnp.float32)
    params2 = _make_params(kp2, input2, hidden2, classes2)
    ref2 = _reference_forward(x2, params2, num_hidden2)

    out2_f32 = jax.block_until_ready(
        student_net_forward(x2, params2, num_hidden2, use_bf16_matmul=False))
    assert out2_f32.shape == (batch2, classes2)
    assert jnp.allclose(out2_f32, ref2, atol=1e-3, rtol=1e-3)

    out2_bf16 = jax.block_until_ready(
        student_net_forward(x2, params2, num_hidden2, use_bf16_matmul=True))
    assert out2_bf16.shape == (batch2, classes2)
    assert jnp.allclose(out2_bf16, ref2, atol=1e-1, rtol=1e-1)

    print("KERNEL_OK")
</pallas_src>

<mosaic_0001>
module attributes {stable_mosaic.version = 11 : i64} {
  func.func @_student_net_kernel(%arg0: i32, %arg1: memref<8x128xf32, #tpu.memory_space<vmem>>, %arg2: memref<128x128xf32, #tpu.memory_space<vmem>>, %arg3: memref<1x128xf32, #tpu.memory_space<vmem>>, %arg4: memref<128x128xf32, #tpu.memory_space<vmem>>, %arg5: memref<1x128xf32, #tpu.memory_space<vmem>>, %arg6: memref<128x128xf32, #tpu.memory_space<vmem>>, %arg7: memref<1x128xf32, #tpu.memory_space<vmem>>, %arg8: memref<8x128xf32, #tpu.memory_space<vmem>>) attributes {dimension_semantics = [#tpu.dimension_semantics<parallel>], iteration_bounds = array<i64: 1>, scalar_prefetch = 0 : i64, scratch_operands = 0 : i64, tpu.core_type = #tpu.core_type<tc>, window_params = [{transform_indices = @transform_0, window_bounds = array<i64: 8, 128>}, {pipeline_mode = #tpu.pipeline_mode<synchronous>, transform_indices = @transform_1, window_bounds = array<i64: 128, 128>}, {pipeline_mode = #tpu.pipeline_mode<synchronous>, transform_indices = @transform_2, window_bounds = array<i64: 1, 128>}, {pipeline_mode = #tpu.pipeline_mode<synchronous>, transform_indices = @transform_3, window_bounds = array<i64: 128, 128>}, {pipeline_mode = #tpu.pipeline_mode<synchronous>, transform_indices = @transform_4, window_bounds = array<i64: 1, 128>}, {pipeline_mode = #tpu.pipeline_mode<synchronous>, transform_indices = @transform_5, window_bounds = array<i64: 128, 128>}, {pipeline_mode = #tpu.pipeline_mode<synchronous>, transform_indices = @transform_6, window_bounds = array<i64: 1, 128>}, {transform_indices = @transform_7, window_bounds = array<i64: 8, 128>}]} {
    %c0 = arith.constant 0 : index
    %c0_0 = arith.constant 0 : index
    %0 = vector.load %arg1[%c0, %c0_0] : memref<8x128xf32, #tpu.memory_space<vmem>>, vector<8x128xf32>
    %c0_1 = arith.constant 0 : index
    %c0_2 = arith.constant 0 : index
    %1 = vector.load %arg2[%c0_1, %c0_2] : memref<128x128xf32, #tpu.memory_space<vmem>>, vector<128x128xf32>
    %cst = arith.constant dense<0.000000e+00> : vector<8x128xf32>
    %2 = tpu.matmul %0, %1, %cst {dimension_numbers = #tpu.dot_dimension_numbers<[1], [0], [0], [1], [0, 0, 1, 1], [], []>} : vector<8x128xf32>, vector<128x128xf32>, vector<8x128xf32> -> vector<8x128xf32>
    %c0_3 = arith.constant 0 : index
    %c0_4 = arith.constant 0 : index
    %3 = vector.load %arg3[%c0_3, %c0_4] : memref<1x128xf32, #tpu.memory_space<vmem>>, vector<1x128xf32>
    %4 = vector.broadcast %3 : vector<1x128xf32> to vector<8x128xf32>
    %5 = arith.addf %2, %4 : vector<8x128xf32>
    %cst_5 = arith.constant 0.000000e+00 : f32
    %6 = vector.broadcast %cst_5 : f32 to vector<8x128xf32>
    %7 = arith.maximumf %5, %6 : vector<8x128xf32>
    %c0_6 = arith.constant 0 : index
    %c0_7 = arith.constant 0 : index
    %8 = vector.load %arg4[%c0_6, %c0_7] : memref<128x128xf32, #tpu.memory_space<vmem>>, vector<128x128xf32>
    %c0_8 = arith.constant 0 : index
    %c0_9 = arith.constant 0 : index
    %9 = vector.load %arg5[%c0_8, %c0_9] : memref<1x128xf32, #tpu.memory_space<vmem>>, vector<1x128xf32>
    %cst_10 = arith.constant dense<0.000000e+00> : vector<8x128xf32>
    %10 = tpu.matmul %7, %8, %cst_10 {dimension_numbers = #tpu.dot_dimension_numbers<[1], [0], [0], [1], [0, 0, 1, 1], [], []>} : vector<8x128xf32>, vector<128x128xf32>, vector<8x128xf32> -> vector<8x128xf32>
    %11 = vector.broadcast %9 : vector<1x128xf32> to vector<8x128xf32>
    %12 = arith.addf %10, %11 : vector<8x128xf32>
    %cst_11 = arith.constant 0.000000e+00 : f32
    %13 = vector.broadcast %cst_11 : f32 to vector<8x128xf32>
    %14 = arith.maximumf %12, %13 : vector<8x128xf32>
    %cst_12 = arith.constant dense<0.000000e+00> : vector<8x128xf32>
    %15 = tpu.matmul %14, %8, %cst_12 {dimension_numbers = #tpu.dot_dimension_numbers<[1], [0], [0], [1], [0, 0, 1, 1], [], []>} : vector<8x128xf32>, vector<128x128xf32>, vector<8x128xf32> -> vector<8x128xf32>
    %16 = vector.broadcast %9 : vector<1x128xf32> to vector<8x128xf32>
    %17 = arith.addf %15, %16 : vector<8x128xf32>
    %cst_13 = arith.constant 0.000000e+00 : f32
    %18 = vector.broadcast %cst_13 : f32 to vector<8x128xf32>
    %19 = arith.maximumf %17, %18 : vector<8x128xf32>
    %c0_14 = arith.constant 0 : index
    %c0_15 = arith.constant 0 : index
    %20 = vector.load %arg6[%c0_14, %c0_15] : memref<128x128xf32, #tpu.memory_space<vmem>>, vector<128x128xf32>
    %cst_16 = arith.constant dense<0.000000e+00> : vector<8x128xf32>
    %21 = tpu.matmul %19, %20, %cst_16 {dimension_numbers = #tpu.dot_dimension_numbers<[1], [0], [0], [1], [0, 0, 1, 1], [], []>} : vector<8x128xf32>, vector<128x128xf32>, vector<8x128xf32> -> vector<8x128xf32>
    %c0_17 = arith.constant 0 : index
    %c0_18 = arith.constant 0 : index
    %22 = vector.load %arg7[%c0_17, %c0_18] : memref<1x128xf32, #tpu.memory_space<vmem>>, vector<1x128xf32>
    %23 = vector.broadcast %22 : vector<1x128xf32> to vector<8x128xf32>
    %24 = arith.addf %21, %23 : vector<8x128xf32>
    %c0_19 = arith.constant 0 : index
    %c0_20 = arith.constant 0 : index
    %25 = vector.load %arg8[%c0_19, %c0_20] : memref<8x128xf32, #tpu.memory_space<vmem>>, vector<8x128xf32>
    tpu.vector_store %arg8[%c0_19, %c0_20], %24 {strides = array<i32>} : memref<8x128xf32, #tpu.memory_space<vmem>>, vector<8x128xf32>,
    return
  }
  func.func @transform_0(%arg0: i32) -> (i32, i32) {
    %c0_i32 = arith.constant 0 : i32
    %c0_i32_0 = arith.constant 0 : i32
    return %arg0, %c0_i32 : i32, i32
  }
  func.func @transform_1(%arg0: i32) -> (i32, i32) {
    %c0_i32 = arith.constant 0 : i32
    %c0_i32_0 = arith.constant 0 : i32
    %c0_i32_1 = arith.constant 0 : i32
    return %c0_i32, %c0_i32_0 : i32, i32
  }
  func.func @transform_2(%arg0: i32) -> (i32, i32) {
    %c0_i32 = arith.constant 0 : i32
    %c0_i32_0 = arith.constant 0 : i32
    %c0_i32_1 = arith.constant 0 : i32
    return %c0_i32, %c0_i32_0 : i32, i32
  }
  func.func @transform_3(%arg0: i32) -> (i32, i32) {
    %c0_i32 = arith.constant 0 : i32
    %c0_i32_0 = arith.constant 0 : i32
    %c0_i32_1 = arith.constant 0 : i32
    return %c0_i32, %c0_i32_0 : i32, i32
  }
  func.func @transform_4(%arg0: i32) -> (i32, i32) {
    %c0_i32 = arith.constant 0 : i32
    %c0_i32_0 = arith.constant 0 : i32
    %c0_i32_1 = arith.constant 0 : i32
    return %c0_i32, %c0_i32_0 : i32, i32
  }
  func.func @transform_5(%arg0: i32) -> (i32, i32) {
    %c0_i32 = arith.constant 0 : i32
    %c0_i32_0 = arith.constant 0 : i32
    %c0_i32_1 = arith.constant 0 : i32
    return %c0_i32, %c0_i32_0 : i32, i32
  }
  func.func @transform_6(%arg0: i32) -> (i32, i32) {
    %c0_i32 = arith.constant 0 : i32
    %c0_i32_0 = arith.constant 0 : i32
    %c0_i32_1 = arith.constant 0 : i32
    return %c0_i32, %c0_i32_0 : i32, i32
  }
  func.func @transform_7(%arg0: i32) -> (i32, i32) {
    %c0_i32 = arith.constant 0 : i32
    %c0_i32_0 = arith.constant 0 : i32
    return %arg0, %c0_i32 : i32, i32
  }
}

module attributes {stable_mosaic.version = 11 : i64} {
  func.func @_student_net_kernel(%arg0: i32, %arg1: memref<8x128xf32, #tpu.memory_space<vmem>>, %arg2: memref<128x128xf32, #tpu.memory_space<vmem>>, %arg3: memref<1x128xf32, #tpu.memory_space<vmem>>, %arg4: memref<128x128xf32, #tpu.memory_space<vmem>>, %arg5: memref<1x128xf32, #tpu.memory_space<vmem>>, %arg6: memref<128x128xf32, #tpu.memory_space<vmem>>, %arg7: memref<1x128xf32, #tpu.memory_space<vmem>>, %arg8: memref<8x128xf32, #tpu.memory_space<vmem>>) attributes {dimension_semantics = [#tpu.dimension_semantics<parallel>], iteration_bounds = array<i64: 1>, scalar_prefetch = 0 : i64, scratch_operands = 0 : i64, tpu.core_type = #tpu.core_type<tc>, window_params = [{transform_indices = @transform_0, window_bounds = array<i64: 8, 128>}, {pipeline_mode = #tpu.pipeline_mode<synchronous>, transform_indices = @transform_1, window_bounds = array<i64: 128, 128>}, {pipeline_mode = #tpu.pipeline_mode<synchronous>, transform_indices = @transform_2, window_bounds = array<i64: 1, 128>}, {pipeline_mode = #tpu.pipeline_mode<synchronous>, transform_indices = @transform_3, window_bounds = array<i64: 128, 128>}, {pipeline_mode = #tpu.pipeline_mode<synchronous>, transform_indices = @transform_4, window_bounds = array<i64: 1, 128>}, {pipeline_mode = #tpu.pipeline_mode<synchronous>, transform_indices = @transform_5, window_bounds = array<i64: 128, 128>}, {pipeline_mode = #tpu.pipeline_mode<synchronous>, transform_indices = @transform_6, window_bounds = array<i64: 1, 128>}, {transform_indices = @transform_7, window_bounds = array<i64: 8, 128>}]} {
    %c0 = arith.constant 0 : index
    %c0_0 = arith.constant 0 : index
    %0 = vector.load %arg1[%c0, %c0_0] : memref<8x128xf32, #tpu.memory_space<vmem>>, vector<8x128xf32>
    %c0_1 = arith.constant 0 : index
    %c0_2 = arith.constant 0 : index
    %1 = vector.load %arg2[%c0_1, %c0_2] : memref<128x128xf32, #tpu.memory_space<vmem>>, vector<128x128xf32>
    %cst = arith.constant dense<0.000000e+00> : vector<8x128xf32>
    %2 = tpu.matmul %0, %1, %cst {dimension_numbers = #tpu.dot_dimension_numbers<[1], [0], [0], [1], [0, 0, 1, 1], [], []>} : vector<8x128xf32>, vector<128x128xf32>, vector<8x128xf32> -> vector<8x128xf32>
    %c0_3 = arith.constant 0 : index
    %c0_4 = arith.constant 0 : index
    %3 = vector.load %arg3[%c0_3, %c0_4] : memref<1x128xf32, #tpu.memory_space<vmem>>, vector<1x128xf32>
    %4 = vector.broadcast %3 : vector<1x128xf32> to vector<8x128xf32>
    %5 = arith.addf %2, %4 : vector<8x128xf32>
    %cst_5 = arith.constant 0.000000e+00 : f32
    %6 = vector.broadcast %cst_5 : f32 to vector<8x128xf32>
    %7 = arith.maximumf %5, %6 : vector<8x128xf32>
    %c0_6 = arith.constant 0 : index
    %c0_7 = arith.constant 0 : index
    %8 = vector.load %arg4[%c0_6, %c0_7] : memref<128x128xf32, #tpu.memory_space<vmem>>, vector<128x128xf32>
    %c0_8 = arith.constant 0 : index
    %c0_9 = arith.constant 0 : index
    %9 = vector.load %arg5[%c0_8, %c0_9] : memref<1x128xf32, #tpu.memory_space<vmem>>, vector<1x128xf32>
    %cst_10 = arith.constant dense<0.000000e+00> : vector<8x128xf32>
    %10 = tpu.matmul %7, %8, %cst_10 {dimension_numbers = #tpu.dot_dimension_numbers<[1], [0], [0], [1], [0, 0, 1, 1], [], []>} : vector<8x128xf32>, vector<128x128xf32>, vector<8x128xf32> -> vector<8x128xf32>
    %11 = vector.broadcast %9 : vector<1x128xf32> to vector<8x128xf32>
    %12 = arith.addf %10, %11 : vector<8x128xf32>
    %cst_11 = arith.constant 0.000000e+00 : f32
    %13 = vector.broadcast %cst_11 : f32 to vector<8x128xf32>
    %14 = arith.maximumf %12, %13 : vector<8x128xf32>
    %cst_12 = arith.constant dense<0.000000e+00> : vector<8x128xf32>
    %15 = tpu.matmul %14, %8, %cst_12 {dimension_numbers = #tpu.dot_dimension_numbers<[1], [0], [0], [1], [0, 0, 1, 1], [], []>} : vector<8x128xf32>, vector<128x128xf32>, vector<8x128xf32> -> vector<8x128xf32>
    %16 = vector.broadcast %9 : vector<1x128xf32> to vector<8x128xf32>
    %17 = arith.addf %15, %16 : vector<8x128xf32>
    %cst_13 = arith.constant 0.000000e+00 : f32
    %18 = vector.broadcast %cst_13 : f32 to vector<8x128xf32>
    %19 = arith.maximumf %17, %18 : vector<8x128xf32>
    %c0_14 = arith.constant 0 : index
    %c0_15 = arith.constant 0 : index
    %20 = vector.load %arg6[%c0_14, %c0_15] : memref<128x128xf32, #tpu.memory_space<vmem>>, vector<128x128xf32>
    %cst_16 = arith.constant dense<0.000000e+00> : vector<8x128xf32>
    %21 = tpu.matmul %19, %20, %cst_16 {dimension_numbers = #tpu.dot_dimension_numbers<[1], [0], [0], [1], [0, 0, 1, 1], [], []>} : vector<8x128xf32>, vector<128x128xf32>, vector<8x128xf32> -> vector<8x128xf32>
    %c0_17 = arith.constant 0 : index
    %c0_18 = arith.constant 0 : index
    %22 = vector.load %arg7[%c0_17, %c0_18] : memref<1x128xf32, #tpu.memory_space<vmem>>, vector<1x128xf32>
    %23 = vector.broadcast %22 : vector<1x128xf32> to vector<8x128xf32>
    %24 = arith.addf %21, %23 : vector<8x128xf32>
    %c0_19 = arith.constant 0 : index
    %c0_20 = arith.constant 0 : index
    %25 = vector.load %arg8[%c0_19, %c0_20] : memref<8x128xf32, #tpu.memory_space<vmem>>, vector<8x128xf32>
    tpu.vector_store %arg8[%c0_19, %c0_20], %24 {strides = array<i32>} : memref<8x128xf32, #tpu.memory_space<vmem>>, vector<8x128xf32>,
    return
  }
  func.func @transform_0(%arg0: i32) -> (i32, i32) {
    %c0_i32 = arith.constant 0 : i32
    %c0_i32_0 = arith.constant 0 : i32
    return %arg0, %c0_i32 : i32, i32
  }
  func.func @transform_1(%arg0: i32) -> (i32, i32) {
    %c0_i32 = arith.constant 0 : i32
    %c0_i32_0 = arith.constant 0 : i32
    %c0_i32_1 = arith.constant 0 : i32
    return %c0_i32, %c0_i32_0 : i32, i32
  }
  func.func @transform_2(%arg0: i32) -> (i32, i32) {
    %c0_i32 = arith.constant 0 : i32
    %c0_i32_0 = arith.constant 0 : i32
    %c0_i32_1 = arith.constant 0 : i32
    return %c0_i32, %c0_i32_0 : i32, i32
  }
  func.func @transform_3(%arg0: i32) -> (i32, i32) {
    %c0_i32 = arith.constant 0 : i32
    %c0_i32_0 = arith.constant 0 : i32
    %c0_i32_1 = arith.constant 0 : i32
    return %c0_i32, %c0_i32_0 : i32, i32
  }
  func.func @transform_4(%arg0: i32) -> (i32, i32) {
    %c0_i32 = arith.constant 0 : i32
    %c0_i32_0 = arith.constant 0 : i32
    %c0_i32_1 = arith.constant 0 : i32
    return %c0_i32, %c0_i32_0 : i32, i32
  }
  func.func @transform_5(%arg0: i32) -> (i32, i32) {
    %c0_i32 = arith.constant 0 : i32
    %c0_i32_0 = arith.constant 0 : i32
    %c0_i32_1 = arith.constant 0 : i32
    return %c0_i32, %c0_i32_0 : i32, i32
  }
  func.func @transform_6(%arg0: i32) -> (i32, i32) {
    %c0_i32 = arith.constant 0 : i32
    %c0_i32_0 = arith.constant 0 : i32
    %c0_i32_1 = arith.constant 0 : i32
    return %c0_i32, %c0_i32_0 : i32, i32
  }
  func.func @transform_7(%arg0: i32) -> (i32, i32) {
    %c0_i32 = arith.constant 0 : i32
    %c0_i32_0 = arith.constant 0 : i32
    return %arg0, %c0_i32 : i32, i32
  }
}

</mosaic_0001>

<llo_original>
// kernel: tpu_custom_call.1
$region0: #{tpu_custom_call.1}
  #allocation0 [shape = 'u32[]', space=smem, size = 0x4, offset = 0x4, fixed_abs, tag = 'smem constant byte address 0x4 - core index']
  #allocation1 [shape = 'u32[144,128]{1,0:T(1,128)}', space=vmem, size = 0x12000, scoped, tag = 'internal scratch']
  %s0 = inlined_call_operand.hbm [shape: f32[8,128], index: 0, kind: input, shape index: {}]
  %s1 = inlined_call_operand.hbm [shape: f32[128,128], index: 1, kind: input, shape index: {}]
  %s2 = inlined_call_operand.vmem [shape: f32[1,128], index: 2, kind: input, shape index: {}]
  %s3 = inlined_call_operand.hbm [shape: f32[128,128], index: 3, kind: input, shape index: {}]
  %s4 = inlined_call_operand.vmem [shape: f32[1,128], index: 4, kind: input, shape index: {}]
  %s5 = inlined_call_operand.hbm [shape: f32[128,128], index: 5, kind: input, shape index: {}]
  %s6 = inlined_call_operand.vmem [shape: f32[1,128], index: 6, kind: input, shape index: {}]
  %s7 = inlined_call_operand.hbm [shape: f32[8,128], index: 7, kind: output, shape index: {}]
  %s8 = sld [smem:[#allocation0]]
  $region54: #{tpu_custom_call.1} parent=0
    _
  %s10 = ssub.s32 1, %s8
  %s11 = scalar_select 0, %s10, %s8
  $region1: #{tpu_custom_call.1} parent=0
    #allocation2 [shape = 'u8[4096]{0}', space=vmem, size = 0x1000, scoped, tag = 'input window, operand 0, single buffered']
    #allocation3 [shape = 's32[1]{0}', space=sflag, size = 0x4, scoped, tag = 'scoped memory for tpu_custom_call.1']
    #allocation4 [shape = 's32[1]{0}', space=sflag, size = 0x4, scoped, tag = 'scoped memory for tpu_custom_call.1']
    #allocation5 [shape = 'u8[65536]{0}', space=vmem, size = 0x10000, scoped, tag = 'input window, operand 1, single buffered']
    #allocation6 [shape = 's32[1]{0}', space=sflag, size = 0x4, scoped, tag = 'scoped memory for tpu_custom_call.1']
    #allocation7 [shape = 'u8[65536]{0}', space=vmem, size = 0x10000, scoped, tag = 'input window, operand 3, single buffered']
    #allocation8 [shape = 'u8[65536]{0}', space=vmem, size = 0x10000, scoped, tag = 'input window, operand 5, single buffered']
    #allocation9 [shape = 's32[1]{0}', space=sflag, size = 0x4, scoped, tag = 'scoped memory for tpu_custom_call.1']
    #allocation10 [shape = 'u8[4096]{0}', space=vmem, size = 0x1000, scoped, tag = 'output window, operand 0, single buffered']
    %12 = vsyncpa [#allocation3], 0
    %13 = vsyncpa [#allocation6], 0
    %14 = vsyncpa [#allocation9], 0
    %15 = vsyncpa [#allocation4], 0
    // Predicated region
    $region2: #{tpu_custom_call.1} parent=1 // pred_check
      _
    $region3: #{tpu_custom_call.1} parent=1 // pred_check_branch
      %17 = sbr.rel (0) target = $region5
    $region4: #{tpu_custom_call.1} parent=1 // pred_region
      %s19 = ssub.s32 128, 128
      %20 = vsyncadd [#allocation3], %s19
      %s22 = sshll.u32 [#allocation2], 4
      %s23 = int_to_ptr.vmem [resolvable:$true] %s22
      %25 = dma.hbm_to_vmem [thread:$0]  %s0, 128, %s23, [#allocation3]
    $region5: #{tpu_custom_call.1} parent=1 // pred_fallthru
      _
    // Predicated region
    $region6: #{tpu_custom_call.1} parent=1 // pred_check
      _
    $region7: #{tpu_custom_call.1} parent=1 // pred_check_branch
      %27 = sbr.rel (0) target = $region9
    $region8: #{tpu_custom_call.1} parent=1 // pred_region
      %s29 = ssub.s32 2048, 2048
      %30 = vsyncadd [#allocation6], %s29
      %s31 = sshll.u32 [#allocation5], 4
      %s32 = int_to_ptr.vmem [resolvable:$true] %s31
      %37 = dma.hbm_to_vmem [thread:$0]  %s1, 2048, %s32, [#allocation6], 128, 128, 8
    $region9: #{tpu_custom_call.1} parent=1 // pred_fallthru
      _
    // Predicated region
    $region10: #{tpu_custom_call.1} parent=1 // pred_check
      _
    $region11: #{tpu_custom_call.1} parent=1 // pred_check_branch
      %39 = sbr.rel (0) target = $region13
    $region12: #{tpu_custom_call.1} parent=1 // pred_region
      _
    $region13: #{tpu_custom_call.1} parent=1 // pred_fallthru
      _
    // Predicated region
    $region14: #{tpu_custom_call.1} parent=1 // pred_check
      _
    $region15: #{tpu_custom_call.1} parent=1 // pred_check_branch
      %41 = sbr.rel (0) target = $region17
    $region16: #{tpu_custom_call.1} parent=1 // pred_region
      %s43 = ssub.s32 2048, 2048
      %44 = vsyncadd [#allocation6], %s43
      %s45 = sshll.u32 [#allocation7], 4
      %s46 = int_to_ptr.vmem [resolvable:$true] %s45
      %51 = dma.hbm_to_vmem [thread:$0]  %s3, 2048, %s46, [#allocation6], 128, 128, 8
    $region17: #{tpu_custom_call.1} parent=1 // pred_fallthru
      _
    // Predicated region
    $region18: #{tpu_custom_call.1} parent=1 // pred_check
      _
    $region19: #{tpu_custom_call.1} parent=1 // pred_check_branch
      %53 = sbr.rel (0) target = $region21
    $region20: #{tpu_custom_call.1} parent=1 // pred_region
      _
    $region21: #{tpu_custom_call.1} parent=1 // pred_fallthru
      _
    // Predicated region
    $region22: #{tpu_custom_call.1} parent=1 // pred_check
      _
    $region23: #{tpu_custom_call.1} parent=1 // pred_check_branch
      %55 = sbr.rel (0) target = $region25
    $region24: #{tpu_custom_call.1} parent=1 // pred_region
      %s57 = ssub.s32 2048, 2048
      %58 = vsyncadd [#allocation9], %s57
      %s59 = sshll.u32 [#allocation8], 4
      %s60 = int_to_ptr.vmem [resolvable:$true] %s59
      %65 = dma.hbm_to_vmem [thread:$0]  %s5, 2048, %s60, [#allocation9], 128, 128, 8
    $region25: #{tpu_custom_call.1} parent=1 // pred_fallthru
      _
    // Predicated region
    $region26: #{tpu_custom_call.1} parent=1 // pred_check
      _
    $region27: #{tpu_custom_call.1} parent=1 // pred_check_branch
      %67 = sbr.rel (0) target = $region29
    $region28: #{tpu_custom_call.1} parent=1 // pred_region
      _
    $region29: #{tpu_custom_call.1} parent=1 // pred_fallthru
      _
    // Predicated region
    $region30: #{tpu_custom_call.1} parent=1 // pred_check
      _
    $region31: #{tpu_custom_call.1} parent=1 // pred_check_branch
      %69 = sbr.rel (0) target = $region33
    $region32: #{tpu_custom_call.1} parent=1 // pred_region
      %70 = dma.done [#allocation3], 128
    $region33: #{tpu_custom_call.1} parent=1 // pred_fallthru
      _
    // Predicated region
    $region34: #{tpu_custom_call.1} parent=1 // pred_check
      _
    $region35: #{tpu_custom_call.1} parent=1 // pred_check_branch
      %72 = sbr.rel (0) target = $region37
    $region36: #{tpu_custom_call.1} parent=1 // pred_region
      %73 = dma.done [#allocation6], 2048
    $region37: #{tpu_custom_call.1} parent=1 // pred_fallthru
      _
    // Predicated region
    $region38: #{tpu_custom_call.1} parent=1 // pred_check
      _
    $region39: #{tpu_custom_call.1} parent=1 // pred_check_branch
      %75 = sbr.rel (0) target = $region41
    $region40: #{tpu_custom_call.1} parent=1 // pred_region
      %76 = dma.done [#allocation6], 2048
    $region41: #{tpu_custom_call.1} parent=1 // pred_fallthru
      _
    // Predicated region
    $region42: #{tpu_custom_call.1} parent=1 // pred_check
      _
    $region43: #{tpu_custom_call.1} parent=1 // pred_check_branch
      %78 = sbr.rel (0) target = $region45
    $region44: #{tpu_custom_call.1} parent=1 // pred_region
      %79 = dma.done [#allocation9], 2048
    $region45: #{tpu_custom_call.1} parent=1 // pred_fallthru
      _
    %v80 = vld [vmem:[#allocation2] sm:$0xff]
    %v81 = vld [vmem:[#allocation5] sm:$0xff]
    %v82 = vld [vmem:[#allocation5 + $0x8] sm:$0xff]
    %v83 = vld [vmem:[#allocation5 + $0x10] sm:$0xff]
    %v84 = vld [vmem:[#allocation5 + $0x18] sm:$0xff]
    %v85 = vld [vmem:[#allocation5 + $0x20] sm:$0xff]
    %v86 = vld [vmem:[#allocation5 + $0x28] sm:$0xff]
    %v87 = vld [vmem:[#allocation5 + $0x30] sm:$0xff]
    %v88 = vld [vmem:[#allocation5 + $0x38] sm:$0xff]
    %v89 = vld [vmem:[#allocation5 + $0x40] sm:$0xff]
    %v90 = vld [vmem:[#allocation5 + $0x48] sm:$0xff]
    %v91 = vld [vmem:[#allocation5 + $0x50] sm:$0xff]
    %v92 = vld [vmem:[#allocation5 + $0x58] sm:$0xff]
    %v93 = vld [vmem:[#allocation5 + $0x60] sm:$0xff]
    %v94 = vld [vmem:[#allocation5 + $0x68] sm:$0xff]
    %v95 = vld [vmem:[#allocation5 + $0x70] sm:$0xff]
    %v96 = vld [vmem:[#allocation5 + $0x78] sm:$0xff]
    %v97 = vld [vmem:[%s2] sm:$0x1]
    %v99 = vlaneseq
    %v100 = vshrl.u32 %v99, 7
    %v101 = vsub.s32 0, %v100
    %v102 = vrot.slane %v97, %v101
    %104 = vmatprep.subr.mxu0 0.0
    %105 = vmatpush1.msra.mxu0 %v81
    %106 = vmatprep.subr.mxu0 0.0
    %107 = vmatpush1.msra.mxu0 %v82
    %108 = vmatprep.subr.mxu0 0.0
    %109 = vmatpush1.msra.mxu0 %v83
    %110 = vmatprep.subr.mxu0 0.0
    %111 = vmatpush1.msra.mxu0 %v84
    %112 = vmatprep.subr.mxu0 0.0
    %113 = vmatpush1.msra.mxu0 %v85
    %114 = vmatprep.subr.mxu0 0.0
    %115 = vmatpush1.msra.mxu0 %v86
    %116 = vmatprep.subr.mxu0 0.0
    %117 = vmatpush1.msra.mxu0 %v87
    %118 = vmatprep.subr.mxu0 0.0
    %119 = vmatpush1.msra.mxu0 %v88
    %120 = vmatprep.subr.mxu0 0.0
    %121 = vmatpush1.msra.mxu0 %v89
    %122 = vmatprep.subr.mxu0 0.0
    %123 = vmatpush1.msra.mxu0 %v90
    %124 = vmatprep.subr.mxu0 0.0
    %125 = vmatpush1.msra.mxu0 %v91
    %126 = vmatprep.subr.mxu0 0.0
    %127 = vmatpush1.msra.mxu0 %v92
    %128 = vmatprep.subr.mxu0 0.0
    %129 = vmatpush1.msra.mxu0 %v93
    %130 = vmatprep.subr.mxu0 0.0
    %131 = vmatpush1.msra.mxu0 %v94
    %132 = vmatprep.subr.mxu0 0.0
    %133 = vmatpush1.msra.mxu0 %v95
    %134 = vmatprep.subr.mxu0 0.0
    %135 = vmatpush1.msra.mxu0 %v96
    %136 = vmatprep.subr.mxu0 0.0
    %137 = vmatpush1.msra.mxu0 0.0
    %138 = vmatprep.subr.mxu0 0.0
    %139 = vmatpush1.msra.mxu0 0.0
    %140 = vmatprep.subr.mxu0 0.0
    %141 = vmatpush1.msra.mxu0 0.0
    %142 = vmatprep.subr.mxu0 0.0
    %143 = vmatpush1.msra.mxu0 0.0
    %144 = vmatprep.subr.mxu0 0.0
    %145 = vmatpush1.msra.mxu0 0.0
    %146 = vmatprep.subr.mxu0 0.0
    %147 = vmatpush1.msra.mxu0 0.0
    %148 = vmatprep.subr.mxu0 0.0
    %149 = vmatpush1.msra.mxu0 0.0
    %150 = vmatprep.subr.mxu0 0.0
    %151 = vmatpush1.msra.mxu0 0.0
    %152 = vmatprep.subr.mxu0 0.0
    %153 = vmatpush1.msra.mxu0 0.0
    %154 = vmatprep.subr.mxu0 0.0
    %155 = vmatpush1.msra.mxu0 0.0
    %156 = vmatprep.subr.mxu0 0.0
    %157 = vmatpush1.msra.mxu0 0.0
    %158 = vmatprep.subr.mxu0 0.0
    %159 = vmatpush1.msra.mxu0 0.0
    %160 = vmatprep.subr.mxu0 0.0
    %161 = vmatpush1.msra.mxu0 0.0
    %162 = vmatprep.subr.mxu0 0.0
    %163 = vmatpush1.msra.mxu0 0.0
    %164 = vmatprep.subr.mxu0 0.0
    %165 = vmatpush1.msra.mxu0 0.0
    %166 = vmatprep.subr.mxu0 0.0
    %167 = vmatpush1.msra.mxu0 0.0
    %168 = vmatprep.mubr.f32.mxu0 0.0
    %169 = vmatmul.mubr.f32.gmra.mrb[0].mxu0 %v80
    %v170 = vpop.f32.mrb[0].mxu0
    %v171 = vadd.f32 %v102, %v170
    %v172 = vpop.f32.mrb[0].mxu0
    %173 = vdwg.mxu0
    %v174 = vmax.f32 %v171, 0.0
    %v175 = vld [vmem:[#allocation7] sm:$0xff]
    %v176 = vld [vmem:[#allocation7 + $0x8] sm:$0xff]
    %v177 = vld [vmem:[#allocation7 + $0x10] sm:$0xff]
    %v178 = vld [vmem:[#allocation7 + $0x18] sm:$0xff]
    %v179 = vld [vmem:[#allocation7 + $0x20] sm:$0xff]
    %v180 = vld [vmem:[#allocation7 + $0x28] sm:$0xff]
    %v181 = vld [vmem:[#allocation7 + $0x30] sm:$0xff]
    %v182 = vld [vmem:[#allocation7 + $0x38] sm:$0xff]
    %v183 = vld [vmem:[#allocation7 + $0x40] sm:$0xff]
    %v184 = vld [vmem:[#allocation7 + $0x48] sm:$0xff]
    %v185 = vld [vmem:[#allocation7 + $0x50] sm:$0xff]
    %v186 = vld [vmem:[#allocation7 + $0x58] sm:$0xff]
    %v187 = vld [vmem:[#allocation7 + $0x60] sm:$0xff]
    %v188 = vld [vmem:[#allocation7 + $0x68] sm:$0xff]
    %v189 = vld [vmem:[#allocation7 + $0x70] sm:$0xff]
    %v190 = vld [vmem:[#allocation7 + $0x78] sm:$0xff]
    %v191 = vld [vmem:[%s4] sm:$0x1]
    %v193 = vlaneseq
    %v194 = vshrl.u32 %v193, 7
    %v195 = vsub.s32 0, %v194
    %v196 = vrot.slane %v191, %v195
    %198 = vmatprep.subr.mxu0 0.0
    %199 = vmatpush1.msra.mxu0 %v175
    %200 = vmatprep.subr.mxu0 0.0
    %201 = vmatpush1.msra.mxu0 %v176
    %202 = vmatprep.subr.mxu0 0.0
    %203 = vmatpush1.msra.mxu0 %v177
    %204 = vmatprep.subr.mxu0 0.0
    %205 = vmatpush1.msra.mxu0 %v178
    %206 = vmatprep.subr.mxu0 0.0
    %207 = vmatpush1.msra.mxu0 %v179
    %208 = vmatprep.subr.mxu0 0.0
    %209 = vmatpush1.msra.mxu0 %v180
    %210 = vmatprep.subr.mxu0 0.0
    %211 = vmatpush1.msra.mxu0 %v181
    %212 = vmatprep.subr.mxu0 0.0
    %213 = vmatpush1.msra.mxu0 %v182
    %214 = vmatprep.subr.mxu0 0.0
    %215 = vmatpush1.msra.mxu0 %v183
    %216 = vmatprep.subr.mxu0 0.0
    %217 = vmatpush1.msra.mxu0 %v184
    %218 = vmatprep.subr.mxu0 0.0
    %219 = vmatpush1.msra.mxu0 %v185
    %220 = vmatprep.subr.mxu0 0.0
    %221 = vmatpush1.msra.mxu0 %v186
    %222 = vmatprep.subr.mxu0 0.0
    %223 = vmatpush1.msra.mxu0 %v187
    %224 = vmatprep.subr.mxu0 0.0
    %225 = vmatpush1.msra.mxu0 %v188
    %226 = vmatprep.subr.mxu0 0.0
    %227 = vmatpush1.msra.mxu0 %v189
    %228 = vmatprep.subr.mxu0 0.0
    %229 = vmatpush1.msra.mxu0 %v190
    %230 = vmatprep.subr.mxu0 0.0
    %231 = vmatpush1.msra.mxu0 0.0
    %232 = vmatprep.subr.mxu0 0.0
    %233 = vmatpush1.msra.mxu0 0.0
    %234 = vmatprep.subr.mxu0 0.0
    %235 = vmatpush1.msra.mxu0 0.0
    %236 = vmatprep.subr.mxu0 0.0
    %237 = vmatpush1.msra.mxu0 0.0
    %238 = vmatprep.subr.mxu0 0.0
    %239 = vmatpush1.msra.mxu0 0.0
    %240 = vmatprep.subr.mxu0 0.0
    %241 = vmatpush1.msra.mxu0 0.0
    %242 = vmatprep.subr.mxu0 0.0
    %243 = vmatpush1.msra.mxu0 0.0
    %244 = vmatprep.subr.mxu0 0.0
    %245 = vmatpush1.msra.mxu0 0.0
    %246 = vmatprep.subr.mxu0 0.0
    %247 = vmatpush1.msra.mxu0 0.0
    %248 = vmatprep.subr.mxu0 0.0
    %249 = vmatpush1.msra.mxu0 0.0
    %250 = vmatprep.subr.mxu0 0.0
    %251 = vmatpush1.msra.mxu0 0.0
    %252 = vmatprep.subr.mxu0 0.0
    %253 = vmatpush1.msra.mxu0 0.0
    %254 = vmatprep.subr.mxu0 0.0
    %255 = vmatpush1.msra.mxu0 0.0
    %256 = vmatprep.subr.mxu0 0.0
    %257 = vmatpush1.msra.mxu0 0.0
    %258 = vmatprep.subr.mxu0 0.0
    %259 = vmatpush1.msra.mxu0 0.0
    %260 = vmatprep.subr.mxu0 0.0
    %261 = vmatpush1.msra.mxu0 0.0
    %262 = vmatprep.mubr.f32.mxu0 0.0
    %263 = vmatmul.mubr.f32.gmra.mrb[0].mxu0 %v174
    %v264 = vpop.f32.mrb[0].mxu0
    %v265 = vadd.f32 %v196, %v264
    %v266 = vpop.f32.mrb[0].mxu0
    %267 = vdwg.mxu0
    %v268 = vmax.f32 %v265, 0.0
    %269 = vmatprep.subr.mxu0 0.0
    %270 = vmatpush1.msra.mxu0 %v175
    %271 = vmatprep.subr.mxu0 0.0
    %272 = vmatpush1.msra.mxu0 %v176
    %273 = vmatprep.subr.mxu0 0.0
    %274 = vmatpush1.msra.mxu0 %v177
    %275 = vmatprep.subr.mxu0 0.0
    %276 = vmatpush1.msra.mxu0 %v178
    %277 = vmatprep.subr.mxu0 0.0
    %278 = vmatpush1.msra.mxu0 %v179
    %279 = vmatprep.subr.mxu0 0.0
    %280 = vmatpush1.msra.mxu0 %v180
    %281 = vmatprep.subr.mxu0 0.0
    %282 = vmatpush1.msra.mxu0 %v181
    %283 = vmatprep.subr.mxu0 0.0
    %284 = vmatpush1.msra.mxu0 %v182
    %285 = vmatprep.subr.mxu0 0.0
    %286 = vmatpush1.msra.mxu0 %v183
    %287 = vmatprep.subr.mxu0 0.0
    %288 = vmatpush1.msra.mxu0 %v184
    %289 = vmatprep.subr.mxu0 0.0
    %290 = vmatpush1.msra.mxu0 %v185
    %291 = vmatprep.subr.mxu0 0.0
    %292 = vmatpush1.msra.mxu0 %v186
    %293 = vmatprep.subr.mxu0 0.0
    %294 = vmatpush1.msra.mxu0 %v187
    %295 = vmatprep.subr.mxu0 0.0
    %296 = vmatpush1.msra.mxu0 %v188
    %297 = vmatprep.subr.mxu0 0.0
    %298 = vmatpush1.msra.mxu0 %v189
    %299 = vmatprep.subr.mxu0 0.0
    %300 = vmatpush1.msra.mxu0 %v190
    %301 = vmatprep.subr.mxu0 0.0
    %302 = vmatpush1.msra.mxu0 0.0
    %303 = vmatprep.subr.mxu0 0.0
    %304 = vmatpush1.msra.mxu0 0.0
    %305 = vmatprep.subr.mxu0 0.0
    %306 = vmatpush1.msra.mxu0 0.0
    %307 = vmatprep.subr.mxu0 0.0
    %308 = vmatpush1.msra.mxu0 0.0
    %309 = vmatprep.subr.mxu0 0.0
    %310 = vmatpush1.msra.mxu0 0.0
    %311 = vmatprep.subr.mxu0 0.0
    %312 = vmatpush1.msra.mxu0 0.0
    %313 = vmatprep.subr.mxu0 0.0
    %314 = vmatpush1.msra.mxu0 0.0
    %315 = vmatprep.subr.mxu0 0.0
    %316 = vmatpush1.msra.mxu0 0.0
    %317 = vmatprep.subr.mxu0 0.0
    %318 = vmatpush1.msra.mxu0 0.0
    %319 = vmatprep.subr.mxu0 0.0
    %320 = vmatpush1.msra.mxu0 0.0
    %321 = vmatprep.subr.mxu0 0.0
    %322 = vmatpush1.msra.mxu0 0.0
    %323 = vmatprep.subr.mxu0 0.0
    %324 = vmatpush1.msra.mxu0 0.0
    %325 = vmatprep.subr.mxu0 0.0
    %326 = vmatpush1.msra.mxu0 0.0
    %327 = vmatprep.subr.mxu0 0.0
    %328 = vmatpush1.msra.mxu0 0.0
    %329 = vmatprep.subr.mxu0 0.0
    %330 = vmatpush1.msra.mxu0 0.0
    %331 = vmatprep.subr.mxu0 0.0
    %332 = vmatpush1.msra.mxu0 0.0
    %333 = vmatprep.mubr.f32.mxu0 0.0
    %334 = vmatmul.mubr.f32.gmra.mrb[0].mxu0 %v268
    %v335 = vpop.f32.mrb[0].mxu0
    %v336 = vadd.f32 %v196, %v335
    %v337 = vpop.f32.mrb[0].mxu0
    %338 = vdwg.mxu0
    %v339 = vmax.f32 %v336, 0.0
    %v340 = vld [vmem:[#allocation8] sm:$0xff]
    %v341 = vld [vmem:[#allocation8 + $0x8] sm:$0xff]
    %v342 = vld [vmem:[#allocation8 + $0x10] sm:$0xff]
    %v343 = vld [vmem:[#allocation8 + $0x18] sm:$0xff]
    %v344 = vld [vmem:[#allocation8 + $0x20] sm:$0xff]
    %v345 = vld [vmem:[#allocation8 + $0x28] sm:$0xff]
    %v346 = vld [vmem:[#allocation8 + $0x30] sm:$0xff]
    %v347 = vld [vmem:[#allocation8 + $0x38] sm:$0xff]
    %v348 = vld [vmem:[#allocation8 + $0x40] sm:$0xff]
    %v349 = vld [vmem:[#allocation8 + $0x48] sm:$0xff]
    %v350 = vld [vmem:[#allocation8 + $0x50] sm:$0xff]
    %v351 = vld [vmem:[#allocation8 + $0x58] sm:$0xff]
    %v352 = vld [vmem:[#allocation8 + $0x60] sm:$0xff]
    %v353 = vld [vmem:[#allocation8 + $0x68] sm:$0xff]
    %v354 = vld [vmem:[#allocation8 + $0x70] sm:$0xff]
    %v355 = vld [vmem:[#allocation8 + $0x78] sm:$0xff]
    %v356 = vld [vmem:[%s6] sm:$0x1]
    %v358 = vlaneseq
    %v359 = vshrl.u32 %v358, 7
    %v360 = vsub.s32 0, %v359
    %v361 = vrot.slane %v356, %v360
    %363 = vmatprep.subr.mxu0 0.0
    %364 = vmatpush1.msra.mxu0 %v340
    %365 = vmatprep.subr.mxu0 0.0
    %366 = vmatpush1.msra.mxu0 %v341
    %367 = vmatprep.subr.mxu0 0.0
    %368 = vmatpush1.msra.mxu0 %v342
    %369 = vmatprep.subr.mxu0 0.0
    %370 = vmatpush1.msra.mxu0 %v343
    %371 = vmatprep.subr.mxu0 0.0
    %372 = vmatpush1.msra.mxu0 %v344
    %373 = vmatprep.subr.mxu0 0.0
    %374 = vmatpush1.msra.mxu0 %v345
    %375 = vmatprep.subr.mxu0 0.0
    %376 = vmatpush1.msra.mxu0 %v346
    %377 = vmatprep.subr.mxu0 0.0
    %378 = vmatpush1.msra.mxu0 %v347
    %379 = vmatprep.subr.mxu0 0.0
    %380 = vmatpush1.msra.mxu0 %v348
    %381 = vmatprep.subr.mxu0 0.0
    %382 = vmatpush1.msra.mxu0 %v349
    %383 = vmatprep.subr.mxu0 0.0
    %384 = vmatpush1.msra.mxu0 %v350
    %385 = vmatprep.subr.mxu0 0.0
    %386 = vmatpush1.msra.mxu0 %v351
    %387 = vmatprep.subr.mxu0 0.0
    %388 = vmatpush1.msra.mxu0 %v352
    %389 = vmatprep.subr.mxu0 0.0
    %390 = vmatpush1.msra.mxu0 %v353
    %391 = vmatprep.subr.mxu0 0.0
    %392 = vmatpush1.msra.mxu0 %v354
    %393 = vmatprep.subr.mxu0 0.0
    %394 = vmatpush1.msra.mxu0 %v355
    %395 = vmatprep.subr.mxu0 0.0
    %396 = vmatpush1.msra.mxu0 0.0
    %397 = vmatprep.subr.mxu0 0.0
    %398 = vmatpush1.msra.mxu0 0.0
    %399 = vmatprep.subr.mxu0 0.0
    %400 = vmatpush1.msra.mxu0 0.0
    %401 = vmatprep.subr.mxu0 0.0
    %402 = vmatpush1.msra.mxu0 0.0
    %403 = vmatprep.subr.mxu0 0.0
    %404 = vmatpush1.msra.mxu0 0.0
    %405 = vmatprep.subr.mxu0 0.0
    %406 = vmatpush1.msra.mxu0 0.0
    %407 = vmatprep.subr.mxu0 0.0
    %408 = vmatpush1.msra.mxu0 0.0
    %409 = vmatprep.subr.mxu0 0.0
    %410 = vmatpush1.msra.mxu0 0.0
    %411 = vmatprep.subr.mxu0 0.0
    %412 = vmatpush1.msra.mxu0 0.0
    %413 = vmatprep.subr.mxu0 0.0
    %414 = vmatpush1.msra.mxu0 0.0
    %415 = vmatprep.subr.mxu0 0.0
    %416 = vmatpush1.msra.mxu0 0.0
    %417 = vmatprep.subr.mxu0 0.0
    %418 = vmatpush1.msra.mxu0 0.0
    %419 = vmatprep.subr.mxu0 0.0
    %420 = vmatpush1.msra.mxu0 0.0
    %421 = vmatprep.subr.mxu0 0.0
    %422 = vmatpush1.msra.mxu0 0.0
    %423 = vmatprep.subr.mxu0 0.0
    %424 = vmatpush1.msra.mxu0 0.0
    %425 = vmatprep.subr.mxu0 0.0
    %426 = vmatpush1.msra.mxu0 0.0
    %427 = vmatprep.mubr.f32.mxu0 0.0
    %428 = vmatmul.mubr.f32.gmra.mrb[0].mxu0 %v339
    %v429 = vpop.f32.mrb[0].mxu0
    %v430 = vadd.f32 %v361, %v429
    %v431 = vpop.f32.mrb[0].mxu0
    %432 = vdwg.mxu0
    %433 = vst [vmem:[#allocation10] sm:$0xff] %v430
    // Predicated region
    $region46: #{tpu_custom_call.1} parent=1 // pred_check
      _
    $region47: #{tpu_custom_call.1} parent=1 // pred_check_branch
      %435 = sbr.rel (0) target = $region49
    $region48: #{tpu_custom_call.1} parent=1 // pred_region
      %s437 = ssub.s32 128, 128
      %438 = vsyncadd [#allocation4], %s437
      %s440 = sshll.u32 [#allocation10], 4
      %s441 = int_to_ptr.vmem [resolvable:$true] %s440
      %443 = dma.vmem_to_hbm [thread:$0]  %s441, 128, %s7, [#allocation4]
    $region49: #{tpu_custom_call.1} parent=1 // pred_fallthru
      _
    // Predicated region
    $region50: #{tpu_custom_call.1} parent=1 // pred_check
      _
    $region51: #{tpu_custom_call.1} parent=1 // pred_check_branch
      %445 = sbr.rel (0) target = $region53
    $region52: #{tpu_custom_call.1} parent=1 // pred_region
      %446 = dma.done [#allocation4], 128
    $region53: #{tpu_custom_call.1} parent=1 // pred_fallthru
      _
    %447 = vsyncpa [#allocation3], 1
    %448 = vsyncpa [#allocation6], 1
    %449 = vsyncpa [#allocation9], 1
    %450 = vsyncpa [#allocation4], 1

// kernel: tpu_custom_call.1
$region0: #{tpu_custom_call.1}
  #allocation0 [shape = 'u32[]', space=smem, size = 0x4, offset = 0x4, fixed_abs, tag = 'smem constant byte address 0x4 - core index']
  #allocation1 [shape = 'u32[144,128]{1,0:T(1,128)}', space=vmem, size = 0x12000, scoped, tag = 'internal scratch']
  %s0 = inlined_call_operand.hbm [shape: f32[8,128], index: 0, kind: input, shape index: {}]
  %s1 = inlined_call_operand.hbm [shape: f32[128,128], index: 1, kind: input, shape index: {}]
  %s2 = inlined_call_operand.vmem [shape: f32[1,128], index: 2, kind: input, shape index: {}]
  %s3 = inlined_call_operand.hbm [shape: f32[128,128], index: 3, kind: input, shape index: {}]
  %s4 = inlined_call_operand.vmem [shape: f32[1,128], index: 4, kind: input, shape index: {}]
  %s5 = inlined_call_operand.hbm [shape: f32[128,128], index: 5, kind: input, shape index: {}]
  %s6 = inlined_call_operand.vmem [shape: f32[1,128], index: 6, kind: input, shape index: {}]
  %s7 = inlined_call_operand.hbm [shape: f32[8,128], index: 7, kind: output, shape index: {}]
  %s8 = sld [smem:[#allocation0]]
  $region54: #{tpu_custom_call.1} parent=0
    _
  %s10 = ssub.s32 1, %s8
  %s11 = scalar_select 0, %s10, %s8
  $region1: #{tpu_custom_call.1} parent=0
    #allocation2 [shape = 'u8[4096]{0}', space=vmem, size = 0x1000, scoped, tag = 'input window, operand 0, single buffered']
    #allocation3 [shape = 's32[1]{0}', space=sflag, size = 0x4, scoped, tag = 'scoped memory for tpu_custom_call.1']
    #allocation4 [shape = 's32[1]{0}', space=sflag, size = 0x4, scoped, tag = 'scoped memory for tpu_custom_call.1']
    #allocation5 [shape = 'u8[65536]{0}', space=vmem, size = 0x10000, scoped, tag = 'input window, operand 1, single buffered']
    #allocation6 [shape = 's32[1]{0}', space=sflag, size = 0x4, scoped, tag = 'scoped memory for tpu_custom_call.1']
    #allocation7 [shape = 'u8[65536]{0}', space=vmem, size = 0x10000, scoped, tag = 'input window, operand 3, single buffered']
    #allocation8 [shape = 'u8[65536]{0}', space=vmem, size = 0x10000, scoped, tag = 'input window, operand 5, single buffered']
    #allocation9 [shape = 's32[1]{0}', space=sflag, size = 0x4, scoped, tag = 'scoped memory for tpu_custom_call.1']
    #allocation10 [shape = 'u8[4096]{0}', space=vmem, size = 0x1000, scoped, tag = 'output window, operand 0, single buffered']
    %12 = vsyncpa [#allocation3], 0
    %13 = vsyncpa [#allocation6], 0
    %14 = vsyncpa [#allocation9], 0
    %15 = vsyncpa [#allocation4], 0
    // Predicated region
    $region2: #{tpu_custom_call.1} parent=1 // pred_check
      _
    $region3: #{tpu_custom_call.1} parent=1 // pred_check_branch
      %17 = sbr.rel (0) target = $region5
    $region4: #{tpu_custom_call.1} parent=1 // pred_region
      %s19 = ssub.s32 128, 128
      %20 = vsyncadd [#allocation3], %s19
      %s22 = sshll.u32 [#allocation2], 4
      %s23 = int_to_ptr.vmem [resolvable:$true] %s22
      %25 = dma.hbm_to_vmem [thread:$0]  %s0, 128, %s23, [#allocation3]
    $region5: #{tpu_custom_call.1} parent=1 // pred_fallthru
      _
    // Predicated region
    $region6: #{tpu_custom_call.1} parent=1 // pred_check
      _
    $region7: #{tpu_custom_call.1} parent=1 // pred_check_branch
      %27 = sbr.rel (0) target = $region9
    $region8: #{tpu_custom_call.1} parent=1 // pred_region
      %s29 = ssub.s32 2048, 2048
      %30 = vsyncadd [#allocation6], %s29
      %s31 = sshll.u32 [#allocation5], 4
      %s32 = int_to_ptr.vmem [resolvable:$true] %s31
      %37 = dma.hbm_to_vmem [thread:$0]  %s1, 2048, %s32, [#allocation6], 128, 128, 8
    $region9: #{tpu_custom_call.1} parent=1 // pred_fallthru
      _
    // Predicated region
    $region10: #{tpu_custom_call.1} parent=1 // pred_check
      _
    $region11: #{tpu_custom_call.1} parent=1 // pred_check_branch
      %39 = sbr.rel (0) target = $region13
    $region12: #{tpu_custom_call.1} parent=1 // pred_region
      _
    $region13: #{tpu_custom_call.1} parent=1 // pred_fallthru
      _
    // Predicated region
    $region14: #{tpu_custom_call.1} parent=1 // pred_check
      _
    $region15: #{tpu_custom_call.1} parent=1 // pred_check_branch
      %41 = sbr.rel (0) target = $region17
    $region16: #{tpu_custom_call.1} parent=1 // pred_region
      %s43 = ssub.s32 2048, 2048
      %44 = vsyncadd [#allocation6], %s43
      %s45 = sshll.u32 [#allocation7], 4
      %s46 = int_to_ptr.vmem [resolvable:$true] %s45
      %51 = dma.hbm_to_vmem [thread:$0]  %s3, 2048, %s46, [#allocation6], 128, 128, 8
    $region17: #{tpu_custom_call.1} parent=1 // pred_fallthru
      _
    // Predicated region
    $region18: #{tpu_custom_call.1} parent=1 // pred_check
      _
    $region19: #{tpu_custom_call.1} parent=1 // pred_check_branch
      %53 = sbr.rel (0) target = $region21
    $region20: #{tpu_custom_call.1} parent=1 // pred_region
      _
    $region21: #{tpu_custom_call.1} parent=1 // pred_fallthru
      _
    // Predicated region
    $region22: #{tpu_custom_call.1} parent=1 // pred_check
      _
    $region23: #{tpu_custom_call.1} parent=1 // pred_check_branch
      %55 = sbr.rel (0) target = $region25
    $region24: #{tpu_custom_call.1} parent=1 // pred_region
      %s57 = ssub.s32 2048, 2048
      %58 = vsyncadd [#allocation9], %s57
      %s59 = sshll.u32 [#allocation8], 4
      %s60 = int_to_ptr.vmem [resolvable:$true] %s59
      %65 = dma.hbm_to_vmem [thread:$0]  %s5, 2048, %s60, [#allocation9], 128, 128, 8
    $region25: #{tpu_custom_call.1} parent=1 // pred_fallthru
      _
    // Predicated region
    $region26: #{tpu_custom_call.1} parent=1 // pred_check
      _
    $region27: #{tpu_custom_call.1} parent=1 // pred_check_branch
      %67 = sbr.rel (0) target = $region29
    $region28: #{tpu_custom_call.1} parent=1 // pred_region
      _
    $region29: #{tpu_custom_call.1} parent=1 // pred_fallthru
      _
    // Predicated region
    $region30: #{tpu_custom_call.1} parent=1 // pred_check
      _
    $region31: #{tpu_custom_call.1} parent=1 // pred_check_branch
      %69 = sbr.rel (0) target = $region33
    $region32: #{tpu_custom_call.1} parent=1 // pred_region
      %70 = dma.done [#allocation3], 128
    $region33: #{tpu_custom_call.1} parent=1 // pred_fallthru
      _
    // Predicated region
    $region34: #{tpu_custom_call.1} parent=1 // pred_check
      _
    $region35: #{tpu_custom_call.1} parent=1 // pred_check_branch
      %72 = sbr.rel (0) target = $region37
    $region36: #{tpu_custom_call.1} parent=1 // pred_region
      %73 = dma.done [#allocation6], 2048
    $region37: #{tpu_custom_call.1} parent=1 // pred_fallthru
      _
    // Predicated region
    $region38: #{tpu_custom_call.1} parent=1 // pred_check
      _
    $region39: #{tpu_custom_call.1} parent=1 // pred_check_branch
      %75 = sbr.rel (0) target = $region41
    $region40: #{tpu_custom_call.1} parent=1 // pred_region
      %76 = dma.done [#allocation6], 2048
    $region41: #{tpu_custom_call.1} parent=1 // pred_fallthru
      _
    // Predicated region
    $region42: #{tpu_custom_call.1} parent=1 // pred_check
      _
    $region43: #{tpu_custom_call.1} parent=1 // pred_check_branch
      %78 = sbr.rel (0) target = $region45
    $region44: #{tpu_custom_call.1} parent=1 // pred_region
      %79 = dma.done [#allocation9], 2048
    $region45: #{tpu_custom_call.1} parent=1 // pred_fallthru
      _
    %v80 = vld [vmem:[#allocation2] sm:$0xff]
    %v81 = vld [vmem:[#allocation5] sm:$0xff]
    %v82 = vld [vmem:[#allocation5 + $0x8] sm:$0xff]
    %v83 = vld [vmem:[#allocation5 + $0x10] sm:$0xff]
    %v84 = vld [vmem:[#allocation5 + $0x18] sm:$0xff]
    %v85 = vld [vmem:[#allocation5 + $0x20] sm:$0xff]
    %v86 = vld [vmem:[#allocation5 + $0x28] sm:$0xff]
    %v87 = vld [vmem:[#allocation5 + $0x30] sm:$0xff]
    %v88 = vld [vmem:[#allocation5 + $0x38] sm:$0xff]
    %v89 = vld [vmem:[#allocation5 + $0x40] sm:$0xff]
    %v90 = vld [vmem:[#allocation5 + $0x48] sm:$0xff]
    %v91 = vld [vmem:[#allocation5 + $0x50] sm:$0xff]
    %v92 = vld [vmem:[#allocation5 + $0x58] sm:$0xff]
    %v93 = vld [vmem:[#allocation5 + $0x60] sm:$0xff]
    %v94 = vld [vmem:[#allocation5 + $0x68] sm:$0xff]
    %v95 = vld [vmem:[#allocation5 + $0x70] sm:$0xff]
    %v96 = vld [vmem:[#allocation5 + $0x78] sm:$0xff]
    %v97 = vld [vmem:[%s2] sm:$0x1]
    %v99 = vlaneseq
    %v100 = vshrl.u32 %v99, 7
    %v101 = vsub.s32 0, %v100
    %v102 = vrot.slane %v97, %v101
    %104 = vmatprep.subr.mxu0 0.0
    %105 = vmatpush1.msra.mxu0 %v81
    %106 = vmatprep.subr.mxu0 0.0
    %107 = vmatpush1.msra.mxu0 %v82
    %108 = vmatprep.subr.mxu0 0.0
    %109 = vmatpush1.msra.mxu0 %v83
    %110 = vmatprep.subr.mxu0 0.0
    %111 = vmatpush1.msra.mxu0 %v84
    %112 = vmatprep.subr.mxu0 0.0
    %113 = vmatpush1.msra.mxu0 %v85
    %114 = vmatprep.subr.mxu0 0.0
    %115 = vmatpush1.msra.mxu0 %v86
    %116 = vmatprep.subr.mxu0 0.0
    %117 = vmatpush1.msra.mxu0 %v87
    %118 = vmatprep.subr.mxu0 0.0
    %119 = vmatpush1.msra.mxu0 %v88
    %120 = vmatprep.subr.mxu0 0.0
    %121 = vmatpush1.msra.mxu0 %v89
    %122 = vmatprep.subr.mxu0 0.0
    %123 = vmatpush1.msra.mxu0 %v90
    %124 = vmatprep.subr.mxu0 0.0
    %125 = vmatpush1.msra.mxu0 %v91
    %126 = vmatprep.subr.mxu0 0.0
    %127 = vmatpush1.msra.mxu0 %v92
    %128 = vmatprep.subr.mxu0 0.0
    %129 = vmatpush1.msra.mxu0 %v93
    %130 = vmatprep.subr.mxu0 0.0
    %131 = vmatpush1.msra.mxu0 %v94
    %132 = vmatprep.subr.mxu0 0.0
    %133 = vmatpush1.msra.mxu0 %v95
    %134 = vmatprep.subr.mxu0 0.0
    %135 = vmatpush1.msra.mxu0 %v96
    %136 = vmatprep.subr.mxu0 0.0
    %137 = vmatpush1.msra.mxu0 0.0
    %138 = vmatprep.subr.mxu0 0.0
    %139 = vmatpush1.msra.mxu0 0.0
    %140 = vmatprep.subr.mxu0 0.0
    %141 = vmatpush1.msra.mxu0 0.0
    %142 = vmatprep.subr.mxu0 0.0
    %143 = vmatpush1.msra.mxu0 0.0
    %144 = vmatprep.subr.mxu0 0.0
    %145 = vmatpush1.msra.mxu0 0.0
    %146 = vmatprep.subr.mxu0 0.0
    %147 = vmatpush1.msra.mxu0 0.0
    %148 = vmatprep.subr.mxu0 0.0
    %149 = vmatpush1.msra.mxu0 0.0
    %150 = vmatprep.subr.mxu0 0.0
    %151 = vmatpush1.msra.mxu0 0.0
    %152 = vmatprep.subr.mxu0 0.0
    %153 = vmatpush1.msra.mxu0 0.0
    %154 = vmatprep.subr.mxu0 0.0
    %155 = vmatpush1.msra.mxu0 0.0
    %156 = vmatprep.subr.mxu0 0.0
    %157 = vmatpush1.msra.mxu0 0.0
    %158 = vmatprep.subr.mxu0 0.0
    %159 = vmatpush1.msra.mxu0 0.0
    %160 = vmatprep.subr.mxu0 0.0
    %161 = vmatpush1.msra.mxu0 0.0
    %162 = vmatprep.subr.mxu0 0.0
    %163 = vmatpush1.msra.mxu0 0.0
    %164 = vmatprep.subr.mxu0 0.0
    %165 = vmatpush1.msra.mxu0 0.0
    %166 = vmatprep.subr.mxu0 0.0
    %167 = vmatpush1.msra.mxu0 0.0
    %168 = vmatprep.mubr.f32.mxu0 0.0
    %169 = vmatmul.mubr.f32.gmra.mrb[0].mxu0 %v80
    %v170 = vpop.f32.mrb[0].mxu0
    %v171 = vadd.f32 %v102, %v170
    %v172 = vpop.f32.mrb[0].mxu0
    %173 = vdwg.mxu0
    %v174 = vmax.f32 %v171, 0.0
    %v175 = vld [vmem:[#allocation7] sm:$0xff]
    %v176 = vld [vmem:[#allocation7 + $0x8] sm:$0xff]
    %v177 = vld [vmem:[#allocation7 + $0x10] sm:$0xff]
    %v178 = vld [vmem:[#allocation7 + $0x18] sm:$0xff]
    %v179 = vld [vmem:[#allocation7 + $0x20] sm:$0xff]
    %v180 = vld [vmem:[#allocation7 + $0x28] sm:$0xff]
    %v181 = vld [vmem:[#allocation7 + $0x30] sm:$0xff]
    %v182 = vld [vmem:[#allocation7 + $0x38] sm:$0xff]
    %v183 = vld [vmem:[#allocation7 + $0x40] sm:$0xff]
    %v184 = vld [vmem:[#allocation7 + $0x48] sm:$0xff]
    %v185 = vld [vmem:[#allocation7 + $0x50] sm:$0xff]
    %v186 = vld [vmem:[#allocation7 + $0x58] sm:$0xff]
    %v187 = vld [vmem:[#allocation7 + $0x60] sm:$0xff]
    %v188 = vld [vmem:[#allocation7 + $0x68] sm:$0xff]
    %v189 = vld [vmem:[#allocation7 + $0x70] sm:$0xff]
    %v190 = vld [vmem:[#allocation7 + $0x78] sm:$0xff]
    %v191 = vld [vmem:[%s4] sm:$0x1]
    %v193 = vlaneseq
    %v194 = vshrl.u32 %v193, 7
    %v195 = vsub.s32 0, %v194
    %v196 = vrot.slane %v191, %v195
    %198 = vmatprep.subr.mxu0 0.0
    %199 = vmatpush1.msra.mxu0 %v175
    %200 = vmatprep.subr.mxu0 0.0
    %201 = vmatpush1.msra.mxu0 %v176
    %202 = vmatprep.subr.mxu0 0.0
    %203 = vmatpush1.msra.mxu0 %v177
    %204 = vmatprep.subr.mxu0 0.0
    %205 = vmatpush1.msra.mxu0 %v178
    %206 = vmatprep.subr.mxu0 0.0
    %207 = vmatpush1.msra.mxu0 %v179
    %208 = vmatprep.subr.mxu0 0.0
    %209 = vmatpush1.msra.mxu0 %v180
    %210 = vmatprep.subr.mxu0 0.0
    %211 = vmatpush1.msra.mxu0 %v181
    %212 = vmatprep.subr.mxu0 0.0
    %213 = vmatpush1.msra.mxu0 %v182
    %214 = vmatprep.subr.mxu0 0.0
    %215 = vmatpush1.msra.mxu0 %v183
    %216 = vmatprep.subr.mxu0 0.0
    %217 = vmatpush1.msra.mxu0 %v184
    %218 = vmatprep.subr.mxu0 0.0
    %219 = vmatpush1.msra.mxu0 %v185
    %220 = vmatprep.subr.mxu0 0.0
    %221 = vmatpush1.msra.mxu0 %v186
    %222 = vmatprep.subr.mxu0 0.0
    %223 = vmatpush1.msra.mxu0 %v187
    %224 = vmatprep.subr.mxu0 0.0
    %225 = vmatpush1.msra.mxu0 %v188
    %226 = vmatprep.subr.mxu0 0.0
    %227 = vmatpush1.msra.mxu0 %v189
    %228 = vmatprep.subr.mxu0 0.0
    %229 = vmatpush1.msra.mxu0 %v190
    %230 = vmatprep.subr.mxu0 0.0
    %231 = vmatpush1.msra.mxu0 0.0
    %232 = vmatprep.subr.mxu0 0.0
    %233 = vmatpush1.msra.mxu0 0.0
    %234 = vmatprep.subr.mxu0 0.0
    %235 = vmatpush1.msra.mxu0 0.0
    %236 = vmatprep.subr.mxu0 0.0
    %237 = vmatpush1.msra.mxu0 0.0
    %238 = vmatprep.subr.mxu0 0.0
    %239 = vmatpush1.msra.mxu0 0.0
    %240 = vmatprep.subr.mxu0 0.0
    %241 = vmatpush1.msra.mxu0 0.0
    %242 = vmatprep.subr.mxu0 0.0
    %243 = vmatpush1.msra.mxu0 0.0
    %244 = vmatprep.subr.mxu0 0.0
    %245 = vmatpush1.msra.mxu0 0.0
    %246 = vmatprep.subr.mxu0 0.0
    %247 = vmatpush1.msra.mxu0 0.0
    %248 = vmatprep.subr.mxu0 0.0
    %249 = vmatpush1.msra.mxu0 0.0
    %250 = vmatprep.subr.mxu0 0.0
    %251 = vmatpush1.msra.mxu0 0.0
    %252 = vmatprep.subr.mxu0 0.0
    %253 = vmatpush1.msra.mxu0 0.0
    %254 = vmatprep.subr.mxu0 0.0
    %255 = vmatpush1.msra.mxu0 0.0
    %256 = vmatprep.subr.mxu0 0.0
    %257 = vmatpush1.msra.mxu0 0.0
    %258 = vmatprep.subr.mxu0 0.0
    %259 = vmatpush1.msra.mxu0 0.0
    %260 = vmatprep.subr.mxu0 0.0
    %261 = vmatpush1.msra.mxu0 0.0
    %262 = vmatprep.mubr.f32.mxu0 0.0
    %263 = vmatmul.mubr.f32.gmra.mrb[0].mxu0 %v174
    %v264 = vpop.f32.mrb[0].mxu0
    %v265 = vadd.f32 %v196, %v264
    %v266 = vpop.f32.mrb[0].mxu0
    %267 = vdwg.mxu0
    %v268 = vmax.f32 %v265, 0.0
    %269 = vmatprep.subr.mxu0 0.0
    %270 = vmatpush1.msra.mxu0 %v175
    %271 = vmatprep.subr.mxu0 0.0
    %272 = vmatpush1.msra.mxu0 %v176
    %273 = vmatprep.subr.mxu0 0.0
    %274 = vmatpush1.msra.mxu0 %v177
    %275 = vmatprep.subr.mxu0 0.0
    %276 = vmatpush1.msra.mxu0 %v178
    %277 = vmatprep.subr.mxu0 0.0
    %278 = vmatpush1.msra.mxu0 %v179
    %279 = vmatprep.subr.mxu0 0.0
    %280 = vmatpush1.msra.mxu0 %v180
    %281 = vmatprep.subr.mxu0 0.0
    %282 = vmatpush1.msra.mxu0 %v181
    %283 = vmatprep.subr.mxu0 0.0
    %284 = vmatpush1.msra.mxu0 %v182
    %285 = vmatprep.subr.mxu0 0.0
    %286 = vmatpush1.msra.mxu0 %v183
    %287 = vmatprep.subr.mxu0 0.0
    %288 = vmatpush1.msra.mxu0 %v184
    %289 = vmatprep.subr.mxu0 0.0
    %290 = vmatpush1.msra.mxu0 %v185
    %291 = vmatprep.subr.mxu0 0.0
    %292 = vmatpush1.msra.mxu0 %v186
    %293 = vmatprep.subr.mxu0 0.0
    %294 = vmatpush1.msra.mxu0 %v187
    %295 = vmatprep.subr.mxu0 0.0
    %296 = vmatpush1.msra.mxu0 %v188
    %297 = vmatprep.subr.mxu0 0.0
    %298 = vmatpush1.msra.mxu0 %v189
    %299 = vmatprep.subr.mxu0 0.0
    %300 = vmatpush1.msra.mxu0 %v190
    %301 = vmatprep.subr.mxu0 0.0
    %302 = vmatpush1.msra.mxu0 0.0
    %303 = vmatprep.subr.mxu0 0.0
    %304 = vmatpush1.msra.mxu0 0.0
    %305 = vmatprep.subr.mxu0 0.0
    %306 = vmatpush1.msra.mxu0 0.0
    %307 = vmatprep.subr.mxu0 0.0
    %308 = vmatpush1.msra.mxu0 0.0
    %309 = vmatprep.subr.mxu0 0.0
    %310 = vmatpush1.msra.mxu0 0.0
    %311 = vmatprep.subr.mxu0 0.0
    %312 = vmatpush1.msra.mxu0 0.0
    %313 = vmatprep.subr.mxu0 0.0
    %314 = vmatpush1.msra.mxu0 0.0
    %315 = vmatprep.subr.mxu0 0.0
    %316 = vmatpush1.msra.mxu0 0.0
    %317 = vmatprep.subr.mxu0 0.0
    %318 = vmatpush1.msra.mxu0 0.0
    %319 = vmatprep.subr.mxu0 0.0
    %320 = vmatpush1.msra.mxu0 0.0
    %321 = vmatprep.subr.mxu0 0.0
    %322 = vmatpush1.msra.mxu0 0.0
    %323 = vmatprep.subr.mxu0 0.0
    %324 = vmatpush1.msra.mxu0 0.0
    %325 = vmatprep.subr.mxu0 0.0
    %326 = vmatpush1.msra.mxu0 0.0
    %327 = vmatprep.subr.mxu0 0.0
    %328 = vmatpush1.msra.mxu0 0.0
    %329 = vmatprep.subr.mxu0 0.0
    %330 = vmatpush1.msra.mxu0 0.0
    %331 = vmatprep.subr.mxu0 0.0
    %332 = vmatpush1.msra.mxu0 0.0
    %333 = vmatprep.mubr.f32.mxu0 0.0
    %334 = vmatmul.mubr.f32.gmra.mrb[0].mxu0 %v268
    %v335 = vpop.f32.mrb[0].mxu0
    %v336 = vadd.f32 %v196, %v335
    %v337 = vpop.f32.mrb[0].mxu0
    %338 = vdwg.mxu0
    %v339 = vmax.f32 %v336, 0.0
    %v340 = vld [vmem:[#allocation8] sm:$0xff]
    %v341 = vld [vmem:[#allocation8 + $0x8] sm:$0xff]
    %v342 = vld [vmem:[#allocation8 + $0x10] sm:$0xff]
    %v343 = vld [vmem:[#allocation8 + $0x18] sm:$0xff]
    %v344 = vld [vmem:[#allocation8 + $0x20] sm:$0xff]
    %v345 = vld [vmem:[#allocation8 + $0x28] sm:$0xff]
    %v346 = vld [vmem:[#allocation8 + $0x30] sm:$0xff]
    %v347 = vld [vmem:[#allocation8 + $0x38] sm:$0xff]
    %v348 = vld [vmem:[#allocation8 + $0x40] sm:$0xff]
    %v349 = vld [vmem:[#allocation8 + $0x48] sm:$0xff]
    %v350 = vld [vmem:[#allocation8 + $0x50] sm:$0xff]
    %v351 = vld [vmem:[#allocation8 + $0x58] sm:$0xff]
    %v352 = vld [vmem:[#allocation8 + $0x60] sm:$0xff]
    %v353 = vld [vmem:[#allocation8 + $0x68] sm:$0xff]
    %v354 = vld [vmem:[#allocation8 + $0x70] sm:$0xff]
    %v355 = vld [vmem:[#allocation8 + $0x78] sm:$0xff]
    %v356 = vld [vmem:[%s6] sm:$0x1]
    %v358 = vlaneseq
    %v359 = vshrl.u32 %v358, 7
    %v360 = vsub.s32 0, %v359
    %v361 = vrot.slane %v356, %v360
    %363 = vmatprep.subr.mxu0 0.0
    %364 = vmatpush1.msra.mxu0 %v340
    %365 = vmatprep.subr.mxu0 0.0
    %366 = vmatpush1.msra.mxu0 %v341
    %367 = vmatprep.subr.mxu0 0.0
    %368 = vmatpush1.msra.mxu0 %v342
    %369 = vmatprep.subr.mxu0 0.0
    %370 = vmatpush1.msra.mxu0 %v343
    %371 = vmatprep.subr.mxu0 0.0
    %372 = vmatpush1.msra.mxu0 %v344
    %373 = vmatprep.subr.mxu0 0.0
    %374 = vmatpush1.msra.mxu0 %v345
    %375 = vmatprep.subr.mxu0 0.0
    %376 = vmatpush1.msra.mxu0 %v346
    %377 = vmatprep.subr.mxu0 0.0
    %378 = vmatpush1.msra.mxu0 %v347
    %379 = vmatprep.subr.mxu0 0.0
    %380 = vmatpush1.msra.mxu0 %v348
    %381 = vmatprep.subr.mxu0 0.0
    %382 = vmatpush1.msra.mxu0 %v349
    %383 = vmatprep.subr.mxu0 0.0
    %384 = vmatpush1.msra.mxu0 %v350
    %385 = vmatprep.subr.mxu0 0.0
    %386 = vmatpush1.msra.mxu0 %v351
    %387 = vmatprep.subr.mxu0 0.0
    %388 = vmatpush1.msra.mxu0 %v352
    %389 = vmatprep.subr.mxu0 0.0
    %390 = vmatpush1.msra.mxu0 %v353
    %391 = vmatprep.subr.mxu0 0.0
    %392 = vmatpush1.msra.mxu0 %v354
    %393 = vmatprep.subr.mxu0 0.0
    %394 = vmatpush1.msra.mxu0 %v355
    %395 = vmatprep.subr.mxu0 0.0
    %396 = vmatpush1.msra.mxu0 0.0
    %397 = vmatprep.subr.mxu0 0.0
    %398 = vmatpush1.msra.mxu0 0.0
    %399 = vmatprep.subr.mxu0 0.0
    %400 = vmatpush1.msra.mxu0 0.0
    %401 = vmatprep.subr.mxu0 0.0
    %402 = vmatpush1.msra.mxu0 0.0
    %403 = vmatprep.subr.mxu0 0.0
    %404 = vmatpush1.msra.mxu0 0.0
    %405 = vmatprep.subr.mxu0 0.0
    %406 = vmatpush1.msra.mxu0 0.0
    %407 = vmatprep.subr.mxu0 0.0
    %408 = vmatpush1.msra.mxu0 0.0
    %409 = vmatprep.subr.mxu0 0.0
    %410 = vmatpush1.msra.mxu0 0.0
    %411 = vmatprep.subr.mxu0 0.0
    %412 = vmatpush1.msra.mxu0 0.0
    %413 = vmatprep.subr.mxu0 0.0
    %414 = vmatpush1.msra.mxu0 0.0
    %415 = vmatprep.subr.mxu0 0.0
    %416 = vmatpush1.msra.mxu0 0.0
    %417 = vmatprep.subr.mxu0 0.0
    %418 = vmatpush1.msra.mxu0 0.0
    %419 = vmatprep.subr.mxu0 0.0
    %420 = vmatpush1.msra.mxu0 0.0
    %421 = vmatprep.subr.mxu0 0.0
    %422 = vmatpush1.msra.mxu0 0.0
    %423 = vmatprep.subr.mxu0 0.0
    %424 = vmatpush1.msra.mxu0 0.0
    %425 = vmatprep.subr.mxu0 0.0
    %426 = vmatpush1.msra.mxu0 0.0
    %427 = vmatprep.mubr.f32.mxu0 0.0
    %428 = vmatmul.mubr.f32.gmra.mrb[0].mxu0 %v339
    %v429 = vpop.f32.mrb[0].mxu0
    %v430 = vadd.f32 %v361, %v429
    %v431 = vpop.f32.mrb[0].mxu0
    %432 = vdwg.mxu0
    %433 = vst [vmem:[#allocation10] sm:$0xff] %v430
    // Predicated region
    $region46: #{tpu_custom_call.1} parent=1 // pred_check
      _
    $region47: #{tpu_custom_call.1} parent=1 // pred_check_branch
      %435 = sbr.rel (0) target = $region49
    $region48: #{tpu_custom_call.1} parent=1 // pred_region
      %s437 = ssub.s32 128, 128
      %438 = vsyncadd [#allocation4], %s437
      %s440 = sshll.u32 [#allocation10], 4
      %s441 = int_to_ptr.vmem [resolvable:$true] %s440
      %443 = dma.vmem_to_hbm [thread:$0]  %s441, 128, %s7, [#allocation4]
    $region49: #{tpu_custom_call.1} parent=1 // pred_fallthru
      _
    // Predicated region
    $region50: #{tpu_custom_call.1} parent=1 // pred_check
      _
    $region51: #{tpu_custom_call.1} parent=1 // pred_check_branch
      %445 = sbr.rel (0) target = $region53
    $region52: #{tpu_custom_call.1} parent=1 // pred_region
      %446 = dma.done [#allocation4], 128
    $region53: #{tpu_custom_call.1} parent=1 // pred_fallthru
      _
    %447 = vsyncpa [#allocation3], 1
    %448 = vsyncpa [#allocation6], 1
    %449 = vsyncpa [#allocation9], 1
    %450 = vsyncpa [#allocation4], 1

</llo_original>
